<compile_context>
chip_gen: v6e
topology: v6e:2x2x1
jax: 0.10.0
libtpu: 0.0.40
codegen_flags: <defaults>
</compile_context>

<pallas_src>
import jax
import jax.numpy as jnp
from jax.experimental import pallas as pl
from jax.experimental.pallas import tpu as pltpu


def _round_up(a, m):
    return (a + m - 1) // m * m


def _largest_tile(total, max_tile, granule):
    """Largest multiple of `granule` <= max_tile that divides `total`."""
    best = granule
    t = granule
    cap = min(max_tile, total)
    while t <= cap:
        if total % t == 0:
            best = t
        t += granule
    return best


def _vmem_capacity_bytes():
    try:
        return int(pltpu.get_tpu_info().vmem_capacity_bytes)
    except Exception:
        return 64 * 1024 * 1024  # conservative fallback (v7x per-TC VMEM)


def _decoder_kernel(x_ref, w_ref, b_ref, o_ref, acc_ref):
    # x_ref: (tm, tk) x.dtype   w_ref: (tk, tn) bf16   b_ref: (1, tn) f32
    # o_ref: (tm, tn) x.dtype   acc_ref: (tm, tn) f32 scratch (lives across K)
    k = pl.program_id(2)

    @pl.when(k == 0)
    def _init():
        acc_ref[...] = jnp.zeros_like(acc_ref)

    acc_ref[...] += jnp.dot(
        x_ref[...].astype(jnp.bfloat16),   # cast folded into the kernel
        w_ref[...],
        preferred_element_type=jnp.float32,
    )

    @pl.when(k == pl.num_programs(2) - 1)
    def _finalize():
        o_ref[...] = (acc_ref[...] + b_ref[...]).astype(o_ref.dtype)


def _decoder_forward(x, weight, bias):
    """x: (B, S, D); weight: (token_size, D) [PyTorch layout]; bias: (token_size,)."""
    B, S, D = x.shape
    N = weight.shape[0]
    M = B * S
    out_dtype = x.dtype
    x_bytes_per_el = x.dtype.itemsize
    out_bytes_per_el = out_dtype.itemsize

    # ---- per-generation VMEM budget ------------------------------------
    vmem_cap = _vmem_capacity_bytes()
    vmem_limit = vmem_cap * 3 // 4            # 96 MiB on v5e/v6e, 48 MiB on v7x
    tile_budget = vmem_limit * 4 // 5         # headroom for compiler scratch
    tm_max = 512 if vmem_cap >= 100 * 1024 * 1024 else 256
    tn_max = 512

    # ---- padded sizes first, then tiles that divide them ----------------
    Mp = _round_up(M, 8)
    Np = _round_up(N, 128)
    Dp = _round_up(D, 128)
    tm = _largest_tile(Mp, tm_max, 8)
    tn = _largest_tile(Np, tn_max, 128)

    # v7x has 2 TensorCores: give a "parallel" axis >= 2 blocks when the
    # problem is big enough (harmless on 1-TC chips).
    if (Mp // tm) * (Np // tn) == 1:
        if Np >= 256:
            c = Np // 128
            d = max(d for d in range(1, c) if c % d == 0)
            tn = 128 * d
        elif Mp >= 256:
            c = Mp // 8
            d = max(d for d in range(1, c) if c % d == 0)
            tm = 8 * d

    # ---- K tiling: single K block if it fits VMEM, otherwise tile Dp ----
    def _vmem_usage(tk_):
        x_b = 2 * tm * tk_ * x_bytes_per_el   # double-buffered activation tile
        w_b = 2 * tk_ * tn * 2                # double-buffered bf16 weight tile
        b_b = 2 * 1 * tn * 4
        o_b = 2 * tm * tn * out_bytes_per_el
        a_b = tm * tn * 4                     # accumulator scratch
        return x_b + w_b + b_b + o_b + a_b

    if _vmem_usage(Dp) <= tile_budget:
        tk = Dp
    else:
        tk = 128
        t = 128
        while t <= Dp:
            if Dp % t == 0 and _vmem_usage(t) <= tile_budget:
                tk = t
            t += 128

    # ---- operand prep (fused under jit; weight/bias prep is one-time
    # static-parameter work in a real model) -----------------------------
    x2d = x.reshape(M, D)
    if (Mp, Dp) != (M, D):
        x2d = jnp.pad(x2d, ((0, Mp - M), (0, Dp - D)))
    # Pre-transpose to (D, N): kernel contracts on the sublane axis of both
    # operands -> no per-tile XLU transpose.
    w_p = weight.astype(jnp.bfloat16).T
    if (Dp, Np) != (D, N):
        w_p = jnp.pad(w_p, ((0, Dp - D), (0, Np - N)))
    b_p = jnp.pad(bias.astype(jnp.float32), (0, Np - N)).reshape(1, Np)

    out = pl.pallas_call(
        _decoder_kernel,
        out_shape=jax.ShapeDtypeStruct((Mp, Np), out_dtype),
        grid_spec=pltpu.PrefetchScalarGridSpec(
            num_scalar_prefetch=0,
            grid=(Mp // tm, Np // tn, Dp // tk),
            in_specs=[
                pl.BlockSpec((tm, tk), lambda i, j, k: (i, k)),   # activations
                pl.BlockSpec((tk, tn), lambda i, j, k: (k, j)),   # (D, N) weight
                pl.BlockSpec((1, tn), lambda i, j, k: (0, j)),    # bias (lane-dense)
            ],
            out_specs=pl.BlockSpec((tm, tn), lambda i, j, k: (i, j)),
            scratch_shapes=[pltpu.VMEM((tm, tn), jnp.float32)],
        ),
        compiler_params=pltpu.CompilerParams(
            dimension_semantics=("parallel", "parallel", "arbitrary"),
            vmem_limit_bytes=int(vmem_limit),
        ),
    )(x2d, w_p, b_p)

    if (Mp, Np) != (M, N):
        out = out[:M, :N]
    return out.reshape(B, S, N)


decoder_forward = jax.jit(_decoder_forward)


if __name__ == "__main__":
    # Small shapes consistent with the module: batch=2, seq=8, d_model=32,
    # token_size=64.
    B, S, D, TOKEN_SIZE = 2, 8, 32, 64

    key = jax.random.PRNGKey(0)
    kx, kw, kb = jax.random.split(key, 3)

    x = jax.random.normal(kx, (B, S, D), dtype=jnp.float32)
    # Deterministic "Linear" params (PyTorch conventions: W (out, in), b (out,))
    weight = jax.random.normal(kw, (TOKEN_SIZE, D), dtype=jnp.float32) * 0.05
    bias = jax.random.normal(kb, (TOKEN_SIZE,), dtype=jnp.float32) * 0.05

    out = decoder_forward(x, weight, bias)
    out = jax.block_until_ready(out)
    assert out.shape == (B, S, TOKEN_SIZE)
    assert out.dtype == x.dtype

    # Reference with matching bf16 matmul inputs + f32 accumulation.
    ref_bf16 = jnp.einsum(
        "bsd,nd->bsn",
        x.astype(jnp.bfloat16), weight.astype(jnp.bfloat16),
        preferred_element_type=jnp.float32,
    ) + bias
    assert jnp.allclose(out, ref_bf16, atol=5e-3, rtol=5e-3)

    # Loose sanity check against the full-f32 reference (bf16 rounding only).
    ref_f32 = jnp.einsum("bsd,nd->bsn", x, weight) + bias
    assert jnp.allclose(out, ref_f32, atol=5e-2, rtol=5e-2)

    print("KERNEL_OK")
</pallas_src>

<mosaic_0001>
module attributes {stable_mosaic.version = 11 : i64} {
  func.func @_decoder_kernel(%arg0: i32, %arg1: i32, %arg2: i32, %arg3: memref<16x128xf32, #tpu.memory_space<vmem>>, %arg4: memref<128x128xbf16, #tpu.memory_space<vmem>>, %arg5: memref<1x128xf32, #tpu.memory_space<vmem>>, %arg6: memref<16x128xf32, #tpu.memory_space<vmem>>, %arg7: memref<16x128xf32, #tpu.memory_space<vmem>>) attributes {dimension_semantics = [#tpu.dimension_semantics<parallel>, #tpu.dimension_semantics<parallel>, #tpu.dimension_semantics<arbitrary>], iteration_bounds = array<i64: 1, 1, 1>, scalar_prefetch = 0 : i64, scratch_operands = 1 : i64, tpu.core_type = #tpu.core_type<tc>, window_params = [{transform_indices = @transform_0, window_bounds = array<i64: 16, 128>}, {transform_indices = @transform_1, window_bounds = array<i64: 128, 128>}, {transform_indices = @transform_2, window_bounds = array<i64: 1, 128>}, {transform_indices = @transform_3, window_bounds = array<i64: 16, 128>}]} {
    %c0_i32 = arith.constant 0 : i32
    %0 = arith.cmpi eq, %arg2, %c0_i32 : i32
    %1 = arith.extui %0 : i1 to i32
    %c0_i32_0 = arith.constant 0 : i32
    %2 = arith.cmpi ne, %1, %c0_i32_0 : i32
    scf.if %2 {
      %cst_10 = arith.constant 0.000000e+00 : f32
      %13 = vector.broadcast %cst_10 : f32 to vector<16x128xf32>
      %c0_11 = arith.constant 0 : index
      %c0_12 = arith.constant 0 : index
      %14 = vector.load %arg7[%c0_11, %c0_12] : memref<16x128xf32, #tpu.memory_space<vmem>>, vector<16x128xf32>
      tpu.vector_store %arg7[%c0_11, %c0_12], %13 {strides = array<i32>} : memref<16x128xf32, #tpu.memory_space<vmem>>, vector<16x128xf32>,
    } else {
    }
    %c0 = arith.constant 0 : index
    %c0_1 = arith.constant 0 : index
    %3 = vector.load %arg7[%c0, %c0_1] : memref<16x128xf32, #tpu.memory_space<vmem>>, vector<16x128xf32>
    %c0_2 = arith.constant 0 : index
    %c0_3 = arith.constant 0 : index
    %4 = vector.load %arg3[%c0_2, %c0_3] : memref<16x128xf32, #tpu.memory_space<vmem>>, vector<16x128xf32>
    %5 = arith.truncf %4 : vector<16x128xf32> to vector<16x128xbf16>
    %c0_4 = arith.constant 0 : index
    %c0_5 = arith.constant 0 : index
    %6 = vector.load %arg4[%c0_4, %c0_5] : memref<128x128xbf16, #tpu.memory_space<vmem>>, vector<128x128xbf16>
    %cst = arith.constant dense<0.000000e+00> : vector<16x128xf32>
    %7 = tpu.matmul %5, %6, %cst {dimension_numbers = #tpu.dot_dimension_numbers<[1], [0], [0], [1], [0, 0, 1, 1], [], []>} : vector<16x128xbf16>, vector<128x128xbf16>, vector<16x128xf32> -> vector<16x128xf32>
    %8 = arith.addf %3, %7 : vector<16x128xf32>
    %c0_6 = arith.constant 0 : index
    %c0_7 = arith.constant 0 : index
    %9 = vector.load %arg7[%c0_6, %c0_7] : memref<16x128xf32, #tpu.memory_space<vmem>>, vector<16x128xf32>
    tpu.vector_store %arg7[%c0_6, %c0_7], %8 {strides = array<i32>} : memref<16x128xf32, #tpu.memory_space<vmem>>, vector<16x128xf32>,
    %c0_i32_8 = arith.constant 0 : i32
    %10 = arith.cmpi eq, %arg2, %c0_i32_8 : i32
    %11 = arith.extui %10 : i1 to i32
    %c0_i32_9 = arith.constant 0 : i32
    %12 = arith.cmpi ne, %11, %c0_i32_9 : i32
    scf.if %12 {
      %c0_10 = arith.constant 0 : index
      %c0_11 = arith.constant 0 : index
      %13 = vector.load %arg7[%c0_10, %c0_11] : memref<16x128xf32, #tpu.memory_space<vmem>>, vector<16x128xf32>
      %c0_12 = arith.constant 0 : index
      %c0_13 = arith.constant 0 : index
      %14 = vector.load %arg5[%c0_12, %c0_13] : memref<1x128xf32, #tpu.memory_space<vmem>>, vector<1x128xf32>
      %15 = vector.broadcast %14 : vector<1x128xf32> to vector<16x128xf32>
      %16 = arith.addf %13, %15 : vector<16x128xf32>
      %c0_14 = arith.constant 0 : index
      %c0_15 = arith.constant 0 : index
      %17 = vector.load %arg6[%c0_14, %c0_15] : memref<16x128xf32, #tpu.memory_space<vmem>>, vector<16x128xf32>
      tpu.vector_store %arg6[%c0_14, %c0_15], %16 {strides = array<i32>} : memref<16x128xf32, #tpu.memory_space<vmem>>, vector<16x128xf32>,
    } else {
    }
    return
  }
  func.func @transform_0(%arg0: i32, %arg1: i32, %arg2: i32) -> (i32, i32) {
    %c0_i32 = arith.constant 0 : i32
    return %arg0, %arg2 : i32, i32
  }
  func.func @transform_1(%arg0: i32, %arg1: i32, %arg2: i32) -> (i32, i32) {
    %c0_i32 = arith.constant 0 : i32
    return %arg2, %arg1 : i32, i32
  }
  func.func @transform_2(%arg0: i32, %arg1: i32, %arg2: i32) -> (i32, i32) {
    %c0_i32 = arith.constant 0 : i32
    %c0_i32_0 = arith.constant 0 : i32
    return %c0_i32, %arg1 : i32, i32
  }
  func.func @transform_3(%arg0: i32, %arg1: i32, %arg2: i32) -> (i32, i32) {
    %c0_i32 = arith.constant 0 : i32
    return %arg0, %arg1 : i32, i32
  }
}

</mosaic_0001>

<llo_original>
// kernel: _decoder_forward.1
$region0: #{_decoder_forward.1}
  #allocation0 [shape = 'u32[]', space=smem, size = 0x4, offset = 0x4, fixed_abs, tag = 'smem constant byte address 0x4 - core index']
  #allocation1 [shape = 'u32[144,128]{1,0:T(1,128)}', space=vmem, size = 0x12000, scoped, tag = 'internal scratch']
  #allocation2 [shape = 'f32[16,128]{1,0:T(8,128)}', space=vmem, size = 0x2000, scoped, tag = 'scratch operand']
  %s0 = inlined_call_operand.vmem [shape: f32[16,128], index: 0, kind: input, shape index: {}]
  %s1 = inlined_call_operand.vmem [shape: bf16[128,128], index: 1, kind: input, shape index: {}]
  %s2 = inlined_call_operand.vmem [shape: f32[1,128], index: 2, kind: input, shape index: {}]
  %s3 = inlined_call_operand.vmem [shape: f32[16,128], index: 3, kind: output, shape index: {}]
  %s4 = sld [smem:[#allocation0]]
  $region30: #{_decoder_forward.1} parent=0
    _
  %s6 = ssub.s32 1, %s4
  %s7 = scalar_select 0, %s6, %s4
  // Predicated region
  $region2: #{_decoder_forward.1} parent=0 // pred_check
    _
  $region3: #{_decoder_forward.1} parent=0 // pred_check_branch
    %9 = sbr.rel (0) target = $region5
  $region4: #{_decoder_forward.1} parent=0 // pred_region
    _
  $region5: #{_decoder_forward.1} parent=0 // pred_fallthru
    _
  // Predicated region
  $region6: #{_decoder_forward.1} parent=0 // pred_check
    _
  $region7: #{_decoder_forward.1} parent=0 // pred_check_branch
    %11 = sbr.rel (0) target = $region9
  $region8: #{_decoder_forward.1} parent=0 // pred_region
    _
  $region9: #{_decoder_forward.1} parent=0 // pred_fallthru
    _
  // Predicated region
  $region10: #{_decoder_forward.1} parent=0 // pred_check
    _
  $region11: #{_decoder_forward.1} parent=0 // pred_check_branch
    %13 = sbr.rel (0) target = $region13
  $region12: #{_decoder_forward.1} parent=0 // pred_region
    _
  $region13: #{_decoder_forward.1} parent=0 // pred_fallthru
    _
  %p15 = scmp.eq.s32.totalorder 0, 0
  // Predicated region
  $region14: #{_decoder_forward.1} parent=0 // pred_check
    %p16 = pneg %p15
  $region15: #{_decoder_forward.1} parent=0 // pred_check_branch
    %18 = sbr.rel (%p16) target = $region17
  $region16: #{_decoder_forward.1} parent=0 // pred_region
    %19 = vst [vmem:[#allocation2] sm:$0xff] 0.0
    %20 = vst [vmem:[#allocation2 + $0x8] sm:$0xff] 0.0
  $region17: #{_decoder_forward.1} parent=0 // pred_fallthru
    _
  %v21 = vld [vmem:[#allocation2] sm:$0xff]
  %v22 = vld [vmem:[#allocation2 + $0x8] sm:$0xff]
  %v23 = vld [vmem:[%s0] sm:$0xff]
  %v24 = vld [vmem:[%s0 + $0x8] sm:$0xff]
  %v25 = vpack.c.bf16 %v24, %v23
  %v26 = vld [vmem:[%s1] sm:$0xf]
  %v27 = vld [vmem:[%s1 + $0x4] sm:$0xf]
  %v28 = vld [vmem:[%s1 + $0x8] sm:$0xf]
  %v29 = vld [vmem:[%s1 + $0xc] sm:$0xf]
  %v30 = vld [vmem:[%s1 + $0x10] sm:$0xf]
  %v31 = vld [vmem:[%s1 + $0x14] sm:$0xf]
  %v32 = vld [vmem:[%s1 + $0x18] sm:$0xf]
  %v33 = vld [vmem:[%s1 + $0x1c] sm:$0xf]
  %v34 = vld [vmem:[%s1 + $0x20] sm:$0xf]
  %v35 = vld [vmem:[%s1 + $0x24] sm:$0xf]
  %v36 = vld [vmem:[%s1 + $0x28] sm:$0xf]
  %v37 = vld [vmem:[%s1 + $0x2c] sm:$0xf]
  %v38 = vld [vmem:[%s1 + $0x30] sm:$0xf]
  %v39 = vld [vmem:[%s1 + $0x34] sm:$0xf]
  %v40 = vld [vmem:[%s1 + $0x38] sm:$0xf]
  %v41 = vld [vmem:[%s1 + $0x3c] sm:$0xf]
  %v58 = vunpack.c.l.b16 %v26
  %v59 = vunpack.c.l.b16 %v27
  %v60 = vunpack.c.l.b16 %v28
  %v61 = vunpack.c.l.b16 %v29
  %v62 = vunpack.c.l.b16 %v30
  %v63 = vunpack.c.l.b16 %v31
  %v64 = vunpack.c.l.b16 %v32
  %v65 = vunpack.c.l.b16 %v33
  %v66 = vunpack.c.l.b16 %v34
  %v67 = vunpack.c.l.b16 %v35
  %v68 = vunpack.c.l.b16 %v36
  %v69 = vunpack.c.l.b16 %v37
  %v70 = vunpack.c.l.b16 %v38
  %v71 = vunpack.c.l.b16 %v39
  %v72 = vunpack.c.l.b16 %v40
  %v73 = vunpack.c.l.b16 %v41
  %v74 = vpack.c.b16 %v59, %v58
  %v75 = vpack.c.b16 %v61, %v60
  %v76 = vpack.c.b16 %v63, %v62
  %v77 = vpack.c.b16 %v65, %v64
  %v78 = vpack.c.b16 %v67, %v66
  %v79 = vpack.c.b16 %v69, %v68
  %v80 = vpack.c.b16 %v71, %v70
  %v81 = vpack.c.b16 %v73, %v72
  %90 = vmatprep.subr.bf16.mxu0 0
  %91 = vmatpush1.bf16.msra.mxu0 %v81
  %92 = vmatprep.subr.bf16.mxu0 0
  %93 = vmatpush1.bf16.msra.mxu0 %v80
  %94 = vmatprep.subr.bf16.mxu0 0
  %95 = vmatpush1.bf16.msra.mxu0 %v79
  %96 = vmatprep.subr.bf16.mxu0 0
  %97 = vmatpush1.bf16.msra.mxu0 %v78
  %98 = vmatprep.subr.bf16.mxu0 0
  %99 = vmatpush1.bf16.msra.mxu0 %v77
  %100 = vmatprep.subr.bf16.mxu0 0
  %101 = vmatpush1.bf16.msra.mxu0 %v76
  %102 = vmatprep.subr.bf16.mxu0 0
  %103 = vmatpush1.bf16.msra.mxu0 %v75
  %104 = vmatprep.subr.bf16.mxu0 0
  %105 = vmatpush1.bf16.msra.mxu0 %v74
  %106 = vmatprep.subr.bf16.mxu0 0
  %107 = vmatpush2.bf16.msra.mxu0 0
  %108 = vmatprep.subr.bf16.mxu0 0
  %109 = vmatpush2.bf16.msra.mxu0 0
  %110 = vmatprep.subr.bf16.mxu0 0
  %111 = vmatpush2.bf16.msra.mxu0 0
  %112 = vmatprep.subr.bf16.mxu0 0
  %113 = vmatpush2.bf16.msra.mxu0 0
  %114 = vmatprep.subr.bf16.mxu0 0
  %115 = vmatpush2.bf16.msra.mxu0 0
  %116 = vmatprep.subr.bf16.mxu0 0
  %117 = vmatpush2.bf16.msra.mxu0 0
  %118 = vmatprep.subr.bf16.mxu0 0
  %119 = vmatpush2.bf16.msra.mxu0 0
  %120 = vmatprep.subr.bf16.mxu0 0
  %121 = vmatpush2.bf16.msra.mxu0 0
  %122 = vmatprep.mubr.bf16.mxu0 0
  %123 = vmatmul.mubr.bf16.gmra.mxu0 %v25
  %v124 = vpop.f32.mrf.mxu0
  %v125 = vadd.f32 0.0, %v124
  %v126 = vpop.f32.mrf.mxu0
  %v127 = vpop.f32.mrf.mxu0
  %v128 = vadd.f32 0.0, %v127
  %v129 = vpop.f32.mrf.mxu0
  %130 = vdwg.mxu0
  %v131 = vadd.f32 %v21, %v125
  %v132 = vadd.f32 %v22, %v128
  %133 = vst [vmem:[#allocation2] sm:$0xff] %v131
  %134 = vst [vmem:[#allocation2 + $0x8] sm:$0xff] %v132
  // Predicated region
  $region18: #{_decoder_forward.1} parent=0 // pred_check
    %p135 = pneg %p15
  $region19: #{_decoder_forward.1} parent=0 // pred_check_branch
    %137 = sbr.rel (%p135) target = $region21
  $region20: #{_decoder_forward.1} parent=0 // pred_region
    %v138 = vld [vmem:[#allocation2] sm:$0xff]
    %v139 = vld [vmem:[#allocation2 + $0x8] sm:$0xff]
    %v140 = vld [vmem:[%s2] sm:$0x1]
    %v142 = vlaneseq
    %v143 = vshrl.u32 %v142, 7
    %v144 = vsub.s32 0, %v143
    %v145 = vrot.slane %v140, %v144
    %v147 = vadd.f32 %v138, %v145
    %v148 = vadd.f32 %v139, %v145
    %149 = vst [vmem:[%s3] sm:$0xff] %v147
    %150 = vst [vmem:[%s3 + $0x8] sm:$0xff] %v148
  $region21: #{_decoder_forward.1} parent=0 // pred_fallthru
    _
  // Predicated region
  $region22: #{_decoder_forward.1} parent=0 // pred_check
    _
  $region23: #{_decoder_forward.1} parent=0 // pred_check_branch
    %152 = sbr.rel (0) target = $region25
  $region24: #{_decoder_forward.1} parent=0 // pred_region
    _
  $region25: #{_decoder_forward.1} parent=0 // pred_fallthru
    _
  // Predicated region
  $region26: #{_decoder_forward.1} parent=0 // pred_check
    _
  $region27: #{_decoder_forward.1} parent=0 // pred_check_branch
    %154 = sbr.rel (0) target = $region29
  $region28: #{_decoder_forward.1} parent=0 // pred_region
    _
  $region29: #{_decoder_forward.1} parent=0 // pred_fallthru
    _

</llo_original>
